<compile_context>
chip_gen: v5e
topology: v5e:2x2
jax: 0.10.0
libtpu: 0.0.40
codegen_flags: <defaults>
</compile_context>

<pallas_src>
import jax
import jax.numpy as jnp
import numpy as np
from jax.experimental import pallas as pl
from jax.experimental.pallas import tpu as pltpu


def nn_forward_kernel(x_ref, w1_ref, b1_ref, w2_ref, b2_ref, out_ref):
    """Fused MLP forward: tanh(x@W1.T+b1) -> (.@W2.T+b2 > 0)."""
    x = x_ref[...]                                              # (TB, in_dim)

    # trans-B contraction: contract x's last dim with W1's last dim (in_dim);
    # the MXU handles the transposed RHS natively, no wrapper transpose.
    h = jnp.tanh(
        jax.lax.dot_general(
            x, w1_ref[...],
            dimension_numbers=(((1,), (1,)), ((), ())),
            preferred_element_type=jnp.float32)
        + b1_ref[...]                                           # (1, hidden)
    )                                                           # (TB, hidden)

    logits = (
        jax.lax.dot_general(
            h, w2_ref[...],
            dimension_numbers=(((1,), (1,)), ((), ())),
            preferred_element_type=jnp.float32)
        + b2_ref[...]                                           # (1, out_dim)
    )                                                           # (TB, out_dim)

    # round(sigmoid(z)) == (z > 0) except on a measure-zero set (tiny nonzero
    # z whose f32 sigmoid is exactly 0.5): skips EUP sigmoid + VPU round.
    out_ref[...] = (logits > 0).astype(out_ref.dtype)


def prepare_params(w1, b1, w2, b2):
    """One-time (out of the hot path) param prep: f32 cast + (1, N) bias rows.

    Weight layouts are kept exactly as PyTorch stores them:
      w1: (hidden, in_dim), w2: (out_dim, hidden) — no transposes.
    """
    return (
        w1.astype(jnp.float32),
        b1.reshape(1, -1).astype(jnp.float32),
        w2.astype(jnp.float32),
        b2.reshape(1, -1).astype(jnp.float32),
    )


def nn_forward(x, w1, b1, w2, b2, *, tb=256):
    """x: (B, in_dim) f32; w1: (hidden, in_dim); b1: (1, hidden);
       w2: (out_dim, hidden); b2: (1, out_dim)  ->  (B, out_dim) in {0,1}."""
    B, in_dim = x.shape
    hidden = w1.shape[0]
    out_dim = w2.shape[0]

    tb = min(tb, B)                       # batch tile (full batch when small)
    grid = (pl.cdiv(B, tb),)

    return pl.pallas_call(
        nn_forward_kernel,
        out_shape=jax.ShapeDtypeStruct((B, out_dim), jnp.float32),
        grid=grid,
        in_specs=[
            pl.BlockSpec((tb, in_dim), lambda i: (i, 0)),       # x: batch tile
            pl.BlockSpec((hidden, in_dim), lambda i: (0, 0)),   # W1 (full)
            pl.BlockSpec((1, hidden), lambda i: (0, 0)),        # b1 (full)
            pl.BlockSpec((out_dim, hidden), lambda i: (0, 0)),  # W2 (full)
            pl.BlockSpec((1, out_dim), lambda i: (0, 0)),       # b2 (full)
        ],
        out_specs=pl.BlockSpec((tb, out_dim), lambda i: (i, 0)),
        compiler_params=pltpu.CompilerParams(
            dimension_semantics=("parallel",)),                 # 2 TCs on v7x
    )(x, w1, b1, w2, b2)


def nn_forward_ref(x, w1, b1, w2, b2):
    """Pure-JAX reference mirroring the PyTorch nn.Sequential forward."""
    h = jnp.tanh(x @ w1.T + b1)
    y = jax.nn.sigmoid(h @ w2.T + b2)
    return jnp.round(y)


if __name__ == "__main__":
    batch = 8          # fills all 8 sublanes of a vreg
    in_dim = 16
    hidden_dim = 32
    out_dim = 4

    key = jax.random.PRNGKey(0)
    kx, kw1, kb1, kw2, kb2 = jax.random.split(key, 5)

    # Parameters scaled so logits stay away from 0 (the sigmoid 0.5 decision
    # boundary) — keeps the rounded comparison against the reference stable.
    x = jax.random.normal(kx, (batch, in_dim), jnp.float32)
    w1 = 0.5 * jax.random.normal(kw1, (hidden_dim, in_dim), jnp.float32)
    b1 = 0.5 * jax.random.normal(kb1, (hidden_dim,), jnp.float32)
    w2 = 0.5 * jax.random.normal(kw2, (out_dim, hidden_dim), jnp.float32)
    b2 = 0.5 * jax.random.normal(kb2, (out_dim,), jnp.float32)

    # One-time param prep (hoisted out of the per-call hot path).
    params = prepare_params(w1, b1, w2, b2)

    out = nn_forward(x, *params)
    jax.block_until_ready(out)

    out_ref = nn_forward_ref(x, w1, b1, w2, b2)
    np.testing.assert_allclose(np.asarray(out), np.asarray(out_ref),
                               rtol=1e-5, atol=1e-5)

    print("KERNEL_OK")
</pallas_src>

<mosaic_0001>
module attributes {stable_mosaic.version = 11 : i64} {
  func.func @nn_forward_kernel(%arg0: i32, %arg1: memref<8x16xf32, #tpu.memory_space<vmem>>, %arg2: memref<32x16xf32, #tpu.memory_space<vmem>>, %arg3: memref<1x32xf32, #tpu.memory_space<vmem>>, %arg4: memref<4x32xf32, #tpu.memory_space<vmem>>, %arg5: memref<1x4xf32, #tpu.memory_space<vmem>>, %arg6: memref<8x4xf32, #tpu.memory_space<vmem>>) attributes {dimension_semantics = [#tpu.dimension_semantics<parallel>], iteration_bounds = array<i64: 1>, scalar_prefetch = 0 : i64, scratch_operands = 0 : i64, tpu.core_type = #tpu.core_type<tc>, window_params = [{transform_indices = @transform_0, window_bounds = array<i64: 8, 16>}, {pipeline_mode = #tpu.pipeline_mode<synchronous>, transform_indices = @transform_1, window_bounds = array<i64: 32, 16>}, {pipeline_mode = #tpu.pipeline_mode<synchronous>, transform_indices = @transform_2, window_bounds = array<i64: 1, 32>}, {pipeline_mode = #tpu.pipeline_mode<synchronous>, transform_indices = @transform_3, window_bounds = array<i64: 4, 32>}, {pipeline_mode = #tpu.pipeline_mode<synchronous>, transform_indices = @transform_4, window_bounds = array<i64: 1, 4>}, {transform_indices = @transform_5, window_bounds = array<i64: 8, 4>}]} {
    %c0 = arith.constant 0 : index
    %c0_0 = arith.constant 0 : index
    %0 = vector.load %arg1[%c0, %c0_0] : memref<8x16xf32, #tpu.memory_space<vmem>>, vector<8x16xf32>
    %c0_1 = arith.constant 0 : index
    %c0_2 = arith.constant 0 : index
    %1 = vector.load %arg2[%c0_1, %c0_2] : memref<32x16xf32, #tpu.memory_space<vmem>>, vector<32x16xf32>
    %cst = arith.constant dense<0.000000e+00> : vector<8x32xf32>
    %2 = tpu.matmul %0, %1, %cst {dimension_numbers = #tpu.dot_dimension_numbers<[1], [1], [0], [0], [0, 0, 1, 0], [], []>} : vector<8x16xf32>, vector<32x16xf32>, vector<8x32xf32> -> vector<8x32xf32>
    %c0_3 = arith.constant 0 : index
    %c0_4 = arith.constant 0 : index
    %3 = vector.load %arg3[%c0_3, %c0_4] : memref<1x32xf32, #tpu.memory_space<vmem>>, vector<1x32xf32>
    %4 = vector.broadcast %3 : vector<1x32xf32> to vector<8x32xf32>
    %5 = arith.addf %2, %4 : vector<8x32xf32>
    %6 = math.tanh %5 : vector<8x32xf32>
    %c0_5 = arith.constant 0 : index
    %c0_6 = arith.constant 0 : index
    %7 = vector.load %arg4[%c0_5, %c0_6] : memref<4x32xf32, #tpu.memory_space<vmem>>, vector<4x32xf32>
    %cst_7 = arith.constant dense<0.000000e+00> : vector<8x4xf32>
    %8 = tpu.matmul %6, %7, %cst_7 {dimension_numbers = #tpu.dot_dimension_numbers<[1], [1], [0], [0], [0, 0, 1, 0], [], []>} : vector<8x32xf32>, vector<4x32xf32>, vector<8x4xf32> -> vector<8x4xf32>
    %c0_8 = arith.constant 0 : index
    %c0_9 = arith.constant 0 : index
    %9 = vector.load %arg5[%c0_8, %c0_9] : memref<1x4xf32, #tpu.memory_space<vmem>>, vector<1x4xf32>
    %10 = vector.broadcast %9 : vector<1x4xf32> to vector<8x4xf32>
    %11 = arith.addf %8, %10 : vector<8x4xf32>
    %cst_10 = arith.constant 0.000000e+00 : f32
    %12 = vector.broadcast %cst_10 : f32 to vector<8x4xf32>
    %13 = arith.cmpf ogt, %11, %12 : vector<8x4xf32>
    %14 = arith.extui %13 : vector<8x4xi1> to vector<8x4xi32>
    %15 = arith.sitofp %14 : vector<8x4xi32> to vector<8x4xf32>
    %c0_11 = arith.constant 0 : index
    %c0_12 = arith.constant 0 : index
    %16 = vector.load %arg6[%c0_11, %c0_12] : memref<8x4xf32, #tpu.memory_space<vmem>>, vector<8x4xf32>
    tpu.vector_store %arg6[%c0_11, %c0_12], %15 {strides = array<i32>} : memref<8x4xf32, #tpu.memory_space<vmem>>, vector<8x4xf32>,
    return
  }
  func.func @transform_0(%arg0: i32) -> (i32, i32) {
    %c0_i32 = arith.constant 0 : i32
    %c0_i32_0 = arith.constant 0 : i32
    return %arg0, %c0_i32 : i32, i32
  }
  func.func @transform_1(%arg0: i32) -> (i32, i32) {
    %c0_i32 = arith.constant 0 : i32
    %c0_i32_0 = arith.constant 0 : i32
    %c0_i32_1 = arith.constant 0 : i32
    return %c0_i32, %c0_i32_0 : i32, i32
  }
  func.func @transform_2(%arg0: i32) -> (i32, i32) {
    %c0_i32 = arith.constant 0 : i32
    %c0_i32_0 = arith.constant 0 : i32
    %c0_i32_1 = arith.constant 0 : i32
    return %c0_i32, %c0_i32_0 : i32, i32
  }
  func.func @transform_3(%arg0: i32) -> (i32, i32) {
    %c0_i32 = arith.constant 0 : i32
    %c0_i32_0 = arith.constant 0 : i32
    %c0_i32_1 = arith.constant 0 : i32
    return %c0_i32, %c0_i32_0 : i32, i32
  }
  func.func @transform_4(%arg0: i32) -> (i32, i32) {
    %c0_i32 = arith.constant 0 : i32
    %c0_i32_0 = arith.constant 0 : i32
    %c0_i32_1 = arith.constant 0 : i32
    return %c0_i32, %c0_i32_0 : i32, i32
  }
  func.func @transform_5(%arg0: i32) -> (i32, i32) {
    %c0_i32 = arith.constant 0 : i32
    %c0_i32_0 = arith.constant 0 : i32
    return %arg0, %c0_i32 : i32, i32
  }
}

</mosaic_0001>

<llo_original>
// kernel: tpu_custom_call.1
$region0: #{tpu_custom_call.1}
  #allocation0 [shape = 'u32[]', space=smem, size = 0x4, offset = 0x4, fixed_abs, tag = 'smem constant byte address 0x4 - core index']
  #allocation1 [shape = 'u32[72,128]{1,0:T(1,128)}', space=vmem, size = 0x9000, scoped, tag = 'internal scratch']
  %s0 = inlined_call_operand.vmem [shape: f32[8,16], index: 0, kind: input, shape index: {}]
  %s1 = inlined_call_operand.vmem [shape: f32[32,16], index: 1, kind: input, shape index: {}]
  %s2 = inlined_call_operand.vmem [shape: f32[1,32], index: 2, kind: input, shape index: {}]
  %s3 = inlined_call_operand.vmem [shape: f32[4,32], index: 3, kind: input, shape index: {}]
  %s4 = inlined_call_operand.vmem [shape: f32[1,4], index: 4, kind: input, shape index: {}]
  %s5 = inlined_call_operand.vmem [shape: f32[8,4], index: 5, kind: output, shape index: {}]
  %s6 = sld [smem:[#allocation0]]
  $region30: #{tpu_custom_call.1} parent=0
    _
  %s8 = ssub.s32 1, %s6
  %s9 = scalar_select 0, %s8, %s6
  // Predicated region
  $region2: #{tpu_custom_call.1} parent=0 // pred_check
    _
  $region3: #{tpu_custom_call.1} parent=0 // pred_check_branch
    %11 = sbr.rel (0) target = $region5
  $region4: #{tpu_custom_call.1} parent=0 // pred_region
    _
  $region5: #{tpu_custom_call.1} parent=0 // pred_fallthru
    _
  // Predicated region
  $region6: #{tpu_custom_call.1} parent=0 // pred_check
    _
  $region7: #{tpu_custom_call.1} parent=0 // pred_check_branch
    %13 = sbr.rel (0) target = $region9
  $region8: #{tpu_custom_call.1} parent=0 // pred_region
    _
  $region9: #{tpu_custom_call.1} parent=0 // pred_fallthru
    _
  // Predicated region
  $region10: #{tpu_custom_call.1} parent=0 // pred_check
    _
  $region11: #{tpu_custom_call.1} parent=0 // pred_check_branch
    %15 = sbr.rel (0) target = $region13
  $region12: #{tpu_custom_call.1} parent=0 // pred_region
    _
  $region13: #{tpu_custom_call.1} parent=0 // pred_fallthru
    _
  // Predicated region
  $region14: #{tpu_custom_call.1} parent=0 // pred_check
    _
  $region15: #{tpu_custom_call.1} parent=0 // pred_check_branch
    %17 = sbr.rel (0) target = $region17
  $region16: #{tpu_custom_call.1} parent=0 // pred_region
    _
  $region17: #{tpu_custom_call.1} parent=0 // pred_fallthru
    _
  // Predicated region
  $region18: #{tpu_custom_call.1} parent=0 // pred_check
    _
  $region19: #{tpu_custom_call.1} parent=0 // pred_check_branch
    %19 = sbr.rel (0) target = $region21
  $region20: #{tpu_custom_call.1} parent=0 // pred_region
    _
  $region21: #{tpu_custom_call.1} parent=0 // pred_fallthru
    _
  %v20 = vld [vmem:[%s0] sm:$0xff]
  %v21 = vld [vmem:[%s1] sm:$0xff]
  %v22 = vld [vmem:[%s1 + $0x8] sm:$0xff]
  %v23 = vld [vmem:[%s1 + $0x10] sm:$0xff]
  %v24 = vld [vmem:[%s1 + $0x18] sm:$0xff]
  %v25 = vld [vmem:[%s2] sm:$0x1]
  %v27 = vperm.slane %v25, 0
  %vm29 = vcmask 130048
  %v31 = vsel %vm29, %v20, 0
  %v34 = vsel %vm29, %v21, 0
  %v37 = vsel %vm29, %v22, 0
  %v40 = vsel %vm29, %v23, 0
  %v43 = vsel %vm29, %v24, 0
  %45 = vmatpush.xpose.msra.mxu0 0.0
  %46 = vmatpush.xpose.msra.mxu0 0.0
  %47 = vmatpush.xpose.msra.mxu0 0.0
  %48 = vmatpush.xpose.msra.mxu0 0.0
  %49 = vmatpush.xpose.msra.mxu0 0.0
  %50 = vmatpush.xpose.msra.mxu0 0.0
  %51 = vmatpush.xpose.msra.mxu0 0.0
  %52 = vmatpush.xpose.msra.mxu0 0.0
  %53 = vmatpush.xpose.msra.mxu0 0.0
  %54 = vmatpush.xpose.msra.mxu0 0.0
  %55 = vmatpush.xpose.msra.mxu0 0.0
  %56 = vmatpush.xpose.msra.mxu0 0.0
  %57 = vmatpush.xpose.msra.mxu0 %v43
  %58 = vmatpush.xpose.msra.mxu0 %v40
  %59 = vmatpush.xpose.msra.mxu0 %v37
  %60 = vmatpush.xpose.msra.mxu0 %v34
  %61 = vmatmul.f32.gmra.mxu0 %v31
  %v62 = vpop.f32.mrf.mxu0
  %v63 = vadd.f32 %v27, %v62
  %64 = vdwg.mxu0
  %v65 = vtanh.pop %v63
  %v66 = vld [vmem:[%s3] sm:$0xf]
  %v67 = vld [vmem:[%s4] sm:$0x1]
  %v69 = vperm.slane %v67, 0
  %vm71 = vcmask 261120
  %v73 = vsel %vm71, %v65, 0
  %v76 = vsel %vm71, %v66, 0
  %78 = vmatpush.xpose.msra.mxu0 0.0
  %79 = vmatpush.xpose.msra.mxu0 0.0
  %80 = vmatpush.xpose.msra.mxu0 0.0
  %81 = vmatpush.xpose.msra.mxu0 0.0
  %82 = vmatpush.xpose.msra.mxu0 0.0
  %83 = vmatpush.xpose.msra.mxu0 0.0
  %84 = vmatpush.xpose.msra.mxu0 0.0
  %85 = vmatpush.xpose.msra.mxu0 0.0
  %86 = vmatpush.xpose.msra.mxu0 0.0
  %87 = vmatpush.xpose.msra.mxu0 0.0
  %88 = vmatpush.xpose.msra.mxu0 0.0
  %89 = vmatpush.xpose.msra.mxu0 0.0
  %90 = vmatpush.xpose.msra.mxu0 0.0
  %91 = vmatpush.xpose.msra.mxu0 0.0
  %92 = vmatpush.xpose.msra.mxu0 0.0
  %93 = vmatpush.xpose.msra.mxu0 %v76
  %94 = vmatmul.f32.gmra.mxu0 %v73
  %v95 = vpop.f32.mrf.mxu0
  %v96 = vadd.f32 %v69, %v95
  %97 = vdwg.mxu0
  %vm98 = vcmp.gt.f32.partialorder %v96, 0.0
  %v99 = vsel %vm98, 1, 0
  %v100 = vcvt.s32.f32 %v99
  %vm101 = vcmask 31744
  %102 = vst.msk [vmem:[%s5] sm:$0xff] %vm101, %v100
  // Predicated region
  $region22: #{tpu_custom_call.1} parent=0 // pred_check
    _
  $region23: #{tpu_custom_call.1} parent=0 // pred_check_branch
    %104 = sbr.rel (0) target = $region25
  $region24: #{tpu_custom_call.1} parent=0 // pred_region
    _
  $region25: #{tpu_custom_call.1} parent=0 // pred_fallthru
    _
  // Predicated region
  $region26: #{tpu_custom_call.1} parent=0 // pred_check
    _
  $region27: #{tpu_custom_call.1} parent=0 // pred_check_branch
    %106 = sbr.rel (0) target = $region29
  $region28: #{tpu_custom_call.1} parent=0 // pred_region
    _
  $region29: #{tpu_custom_call.1} parent=0 // pred_fallthru
    _

</llo_original>
